<compile_context>
chip_gen: v6e
topology: v6e:2x2x1
jax: 0.10.0
libtpu: 0.0.40
codegen_flags: <defaults>
</compile_context>

<pallas_src>
import jax
import jax.numpy as jnp
from jax.experimental import pallas as pl
from jax.experimental.pallas import tpu as pltpu


def _round_up(x, m):
    return ((x + m - 1) // m) * m


def _doc_classifier_kernel(p_ref, s_ref, wt_ref, b_ref, out_ref):
    """One grid step = one tile of `bt` documents.

    p_ref  : (bt, L)      extraction probabilities
    s_ref  : (bt, L, D)   encoded sentences
    wt_ref : (D, C)       linear weight, already transposed
    b_ref  : (1, C)       linear bias
    out_ref: (bt, C)      log-probabilities
    """
    p = p_ref[...].astype(jnp.float32)                  # (bt, L)
    s = s_ref[...].astype(jnp.float32)                  # (bt, L, D)

    # (1) Pool-first: weighted sum over the sequence axis on the VPU plus one
    #     sublane reduce (L == 8 == one sublane group). No per-doc MXU matmuls.
    pooled = jnp.sum(p[:, :, None] * s, axis=1)         # (bt, D)
    p_sum = jnp.sum(p, axis=-1, keepdims=True)          # (bt, 1)

    # (2) Single MXU matmul per tile, f32 accumulation.
    raw = jnp.dot(pooled, wt_ref[...].astype(jnp.float32),
                  preferred_element_type=jnp.float32)   # (bt, C)

    # (3) Deferred normalization: scale the C-wide logits before the bias add
    #     (identical math to normalizing the pooled vector first).
    logit = raw / p_sum + b_ref[...].astype(jnp.float32)

    # (4) Numerically stable log_softmax over the class axis.
    m = jnp.max(logit, axis=-1, keepdims=True)
    shifted = logit - m
    lse = jnp.log(jnp.sum(jnp.exp(shifted), axis=-1, keepdims=True))
    out_ref[...] = (shifted - lse).astype(out_ref.dtype)


def _choose_tile(B, batch_tile):
    """Pick (bt, B_pad): bt % 8 == 0, bt divides B_pad, B_pad >= B.

    Prefers an exact divisor of round_up(B, 8) (no padding copy of s), and
    prefers >= 2 grid steps so both TensorCores get work on v7x.
    """
    B8 = _round_up(max(B, 1), 8)
    bt_cap = max(8, min(_round_up(batch_tile, 8), B8))
    if B8 % bt_cap == 0:
        bt, B_pad = bt_cap, B8
    else:
        # Largest multiple-of-8 divisor of B8 that is <= bt_cap.
        best = 8
        d = 16
        while d <= bt_cap:
            if B8 % d == 0:
                best = d
            d += 8
        if 2 * best >= bt_cap:
            bt, B_pad = best, B8            # no padding copy needed
        else:
            bt, B_pad = bt_cap, _round_up(B8, bt_cap)
    # Ensure >= 2 grid steps when the tile is large enough to split.
    while B_pad // bt < 2 and bt >= 16 and bt % 16 == 0:
        bt //= 2
    return bt, B_pad


def document_classifier_forward_batched(p, s, weight_t, bias, *, batch_tile=1024):
    """Batched forward over B independent documents.

    Args:
      p:        (B, seq_len)             extraction probabilities
      s:        (B, seq_len, sent_size)  encoded sentences
      weight_t: (sent_size, n_classes)   linear weight, PRE-transposed at init
      bias:     (n_classes,)
    Returns:
      (B, n_classes) float32 log-probabilities.
    """
    B, L = p.shape
    Bs, Ls, D = s.shape
    assert (B, L) == (Bs, Ls), "p and s batch/seq dims must match"
    C = weight_t.shape[1]

    bt, B_pad = _choose_tile(B, batch_tile)
    if B_pad != B:
        pad = B_pad - B
        # Only hit when B has no usable divisor (see _choose_tile). Pad p with
        # ones so sum(p) > 0 in the padded rows; they are sliced off below.
        p = jnp.concatenate([p, jnp.ones((pad, L), p.dtype)], axis=0)
        s = jnp.concatenate([s, jnp.zeros((pad, L, D), s.dtype)], axis=0)

    b2 = bias.reshape(1, C)

    out = pl.pallas_call(
        _doc_classifier_kernel,
        out_shape=jax.ShapeDtypeStruct((B_pad, C), jnp.float32),
        grid=(B_pad // bt,),
        in_specs=[
            pl.BlockSpec((bt, L), lambda i: (i, 0)),         # p tile
            pl.BlockSpec((bt, L, D), lambda i: (i, 0, 0)),   # s tile
            pl.BlockSpec((D, C), lambda i: (0, 0)),          # weight (resident)
            pl.BlockSpec((1, C), lambda i: (0, 0)),          # bias (resident)
        ],
        out_specs=pl.BlockSpec((bt, C), lambda i: (i, 0)),
        compiler_params=pltpu.CompilerParams(
            # Batch axis is embarrassingly parallel -> shard across TCs (v7x).
            dimension_semantics=("parallel",),
            # Lift v5e's 16 MiB scoped-VMEM default; ~10 MiB needed at bt=1024.
            vmem_limit_bytes=32 * 1024 * 1024,
        ),
    )(p, s, weight_t, b2)

    return out[:B]


def document_classifier_forward(p, s, weight_t, bias):
    """Single-document forward matching DocumentClassifier.forward.

    Args:
      p:        (seq_len,)
      s:        (seq_len, sent_size)
      weight_t: (sent_size, n_classes)  — pre-transposed nn.Linear weight
      bias:     (n_classes,)
    Returns:
      (n_classes,) log-probabilities.
    """
    L, D = s.shape
    q = document_classifier_forward_batched(
        p.reshape(1, L), s.reshape(1, L, D), weight_t, bias, batch_tile=8)
    return q[0]


def _reference_forward(p, s, weight, bias):
    """Pure-JAX reference mirroring the PyTorch module (PyTorch weight layout)."""
    s_avg = jnp.sum(p[:, None] * s, axis=0) / jnp.sum(p)
    logit = s_avg @ weight.T + bias
    return jax.nn.log_softmax(logit)


if __name__ == "__main__":
    seq_len = 8
    sent_size = 32
    n_classes = 4

    key = jax.random.PRNGKey(0)
    k_p, k_s, k_w, k_b, k_bp, k_bs = jax.random.split(key, 6)

    # Parameters in PyTorch nn.Linear(sent_size, n_classes) layout; transpose
    # hoisted out of the forward path (done once at "init").
    bound = 1.0 / (sent_size ** 0.5)
    weight = jax.random.uniform(k_w, (n_classes, sent_size),
                                minval=-bound, maxval=bound, dtype=jnp.float32)
    bias = jax.random.uniform(k_b, (n_classes,),
                              minval=-bound, maxval=bound, dtype=jnp.float32)
    weight_t = jnp.asarray(weight.T)   # stored pre-transposed: (sent_size, n_classes)

    # --- Single document (module's exact signature) ---
    p = jax.nn.sigmoid(jax.random.normal(k_p, (seq_len,), dtype=jnp.float32))
    s = jax.random.normal(k_s, (seq_len, sent_size), dtype=jnp.float32)

    q = document_classifier_forward(p, s, weight_t, bias)
    q = jax.block_until_ready(q)
    q_ref = _reference_forward(p, s, weight, bias)
    assert q.shape == (n_classes,)
    assert jnp.allclose(q, q_ref, atol=1e-5, rtol=1e-5), (q, q_ref)

    # --- Batched path (throughput-oriented entry point, default tiling) ---
    B = 64
    pb = jax.nn.sigmoid(jax.random.normal(k_bp, (B, seq_len), dtype=jnp.float32))
    sb = jax.random.normal(k_bs, (B, seq_len, sent_size), dtype=jnp.float32)

    qb = document_classifier_forward_batched(pb, sb, weight_t, bias)
    qb = jax.block_until_ready(qb)
    qb_ref = jax.vmap(lambda pi, si: _reference_forward(pi, si, weight, bias))(pb, sb)
    assert qb.shape == (B, n_classes)
    assert jnp.allclose(qb, qb_ref, atol=1e-5, rtol=1e-5), (qb, qb_ref)

    # --- Explicit small tile (exercises multi-step grid / divisor path) ---
    qb2 = document_classifier_forward_batched(pb, sb, weight_t, bias, batch_tile=16)
    qb2 = jax.block_until_ready(qb2)
    assert jnp.allclose(qb2, qb_ref, atol=1e-5, rtol=1e-5)

    print("KERNEL_OK")
</pallas_src>

<mosaic_0001>
module attributes {stable_mosaic.version = 11 : i64} {
  func.func @_doc_classifier_kernel(%arg0: i32, %arg1: memref<8x8xf32, #tpu.memory_space<vmem>>, %arg2: memref<8x8x32xf32, #tpu.memory_space<vmem>>, %arg3: memref<32x4xf32, #tpu.memory_space<vmem>>, %arg4: memref<1x4xf32, #tpu.memory_space<vmem>>, %arg5: memref<8x4xf32, #tpu.memory_space<vmem>>) attributes {dimension_semantics = [#tpu.dimension_semantics<parallel>], iteration_bounds = array<i64: 1>, scalar_prefetch = 0 : i64, scratch_operands = 0 : i64, tpu.core_type = #tpu.core_type<tc>, window_params = [{transform_indices = @transform_0, window_bounds = array<i64: 8, 8>}, {transform_indices = @transform_1, window_bounds = array<i64: 8, 8, 32>}, {pipeline_mode = #tpu.pipeline_mode<synchronous>, transform_indices = @transform_2, window_bounds = array<i64: 32, 4>}, {pipeline_mode = #tpu.pipeline_mode<synchronous>, transform_indices = @transform_3, window_bounds = array<i64: 1, 4>}, {transform_indices = @transform_4, window_bounds = array<i64: 8, 4>}]} {
    %c0 = arith.constant 0 : index
    %c0_0 = arith.constant 0 : index
    %0 = vector.load %arg1[%c0, %c0_0] : memref<8x8xf32, #tpu.memory_space<vmem>>, vector<8x8xf32>
    %c0_1 = arith.constant 0 : index
    %c0_2 = arith.constant 0 : index
    %c0_3 = arith.constant 0 : index
    %1 = vector.load %arg2[%c0_1, %c0_2, %c0_3] : memref<8x8x32xf32, #tpu.memory_space<vmem>>, vector<8x8x32xf32>
    %2 = vector.shape_cast %0 : vector<8x8xf32> to vector<8x8x1xf32>
    %3 = vector.broadcast %2 : vector<8x8x1xf32> to vector<8x8x32xf32>
    %4 = arith.mulf %3, %1 : vector<8x8x32xf32>
    %cst = arith.constant dense<0.000000e+00> : vector<8x32xf32>
    %5 = vector.multi_reduction <add>, %4, %cst [1] : vector<8x8x32xf32> to vector<8x32xf32>
    %cst_4 = arith.constant dense<0.000000e+00> : vector<8xf32>
    %6 = vector.multi_reduction <add>, %0, %cst_4 [1] : vector<8x8xf32> to vector<8xf32>
    %7 = vector.shape_cast %6 : vector<8xf32> to vector<8x1xf32>
    %c0_5 = arith.constant 0 : index
    %c0_6 = arith.constant 0 : index
    %8 = vector.load %arg3[%c0_5, %c0_6] : memref<32x4xf32, #tpu.memory_space<vmem>>, vector<32x4xf32>
    %cst_7 = arith.constant dense<0.000000e+00> : vector<8x4xf32>
    %9 = tpu.matmul %5, %8, %cst_7 {dimension_numbers = #tpu.dot_dimension_numbers<[1], [0], [0], [1], [0, 0, 1, 1], [], []>} : vector<8x32xf32>, vector<32x4xf32>, vector<8x4xf32> -> vector<8x4xf32>
    %10 = vector.broadcast %7 : vector<8x1xf32> to vector<8x4xf32>
    %11 = arith.divf %9, %10 : vector<8x4xf32>
    %c0_8 = arith.constant 0 : index
    %c0_9 = arith.constant 0 : index
    %12 = vector.load %arg4[%c0_8, %c0_9] : memref<1x4xf32, #tpu.memory_space<vmem>>, vector<1x4xf32>
    %13 = vector.broadcast %12 : vector<1x4xf32> to vector<8x4xf32>
    %14 = arith.addf %11, %13 : vector<8x4xf32>
    %cst_10 = arith.constant dense<0xFF800000> : vector<8xf32>
    %15 = vector.multi_reduction <maximumf>, %14, %cst_10 [1] : vector<8x4xf32> to vector<8xf32>
    %16 = vector.shape_cast %15 : vector<8xf32> to vector<8x1xf32>
    %17 = vector.broadcast %16 : vector<8x1xf32> to vector<8x4xf32>
    %18 = arith.subf %14, %17 : vector<8x4xf32>
    %19 = math.exp %18 : vector<8x4xf32>
    %cst_11 = arith.constant dense<0.000000e+00> : vector<8xf32>
    %20 = vector.multi_reduction <add>, %19, %cst_11 [1] : vector<8x4xf32> to vector<8xf32>
    %21 = vector.shape_cast %20 : vector<8xf32> to vector<8x1xf32>
    %22 = math.log %21 : vector<8x1xf32>
    %23 = vector.broadcast %22 : vector<8x1xf32> to vector<8x4xf32>
    %24 = arith.subf %18, %23 : vector<8x4xf32>
    %c0_12 = arith.constant 0 : index
    %c0_13 = arith.constant 0 : index
    %25 = vector.load %arg5[%c0_12, %c0_13] : memref<8x4xf32, #tpu.memory_space<vmem>>, vector<8x4xf32>
    tpu.vector_store %arg5[%c0_12, %c0_13], %24 {strides = array<i32>} : memref<8x4xf32, #tpu.memory_space<vmem>>, vector<8x4xf32>,
    return
  }
  func.func @transform_0(%arg0: i32) -> (i32, i32) {
    %c0_i32 = arith.constant 0 : i32
    %c0_i32_0 = arith.constant 0 : i32
    return %arg0, %c0_i32 : i32, i32
  }
  func.func @transform_1(%arg0: i32) -> (i32, i32, i32) {
    %c0_i32 = arith.constant 0 : i32
    %c0_i32_0 = arith.constant 0 : i32
    %c0_i32_1 = arith.constant 0 : i32
    return %arg0, %c0_i32, %c0_i32_0 : i32, i32, i32
  }
  func.func @transform_2(%arg0: i32) -> (i32, i32) {
    %c0_i32 = arith.constant 0 : i32
    %c0_i32_0 = arith.constant 0 : i32
    %c0_i32_1 = arith.constant 0 : i32
    return %c0_i32, %c0_i32_0 : i32, i32
  }
  func.func @transform_3(%arg0: i32) -> (i32, i32) {
    %c0_i32 = arith.constant 0 : i32
    %c0_i32_0 = arith.constant 0 : i32
    %c0_i32_1 = arith.constant 0 : i32
    return %c0_i32, %c0_i32_0 : i32, i32
  }
  func.func @transform_4(%arg0: i32) -> (i32, i32) {
    %c0_i32 = arith.constant 0 : i32
    %c0_i32_0 = arith.constant 0 : i32
    return %arg0, %c0_i32 : i32, i32
  }
}

</mosaic_0001>

<llo_original>
// kernel: tpu_custom_call.1
$region0: #{tpu_custom_call.1}
  #allocation0 [shape = 'u32[]', space=smem, size = 0x4, offset = 0x4, fixed_abs, tag = 'smem constant byte address 0x4 - core index']
  #allocation1 [shape = 'u32[144,128]{1,0:T(1,128)}', space=vmem, size = 0x12000, scoped, tag = 'internal scratch']
  %s0 = inlined_call_operand.vmem [shape: f32[8,8], index: 0, kind: input, shape index: {}]
  %s1 = inlined_call_operand.hbm [shape: f32[8,8,32], index: 1, kind: input, shape index: {}]
  %s2 = inlined_call_operand.vmem [shape: f32[32,4], index: 2, kind: input, shape index: {}]
  %s3 = inlined_call_operand.vmem [shape: f32[1,4], index: 3, kind: input, shape index: {}]
  %s4 = inlined_call_operand.vmem [shape: f32[8,4], index: 4, kind: output, shape index: {}]
  %s5 = sld [smem:[#allocation0]]
  $region30: #{tpu_custom_call.1} parent=0
    _
  %s7 = ssub.s32 1, %s5
  %s8 = scalar_select 0, %s7, %s5
  $region1: #{tpu_custom_call.1} parent=0
    #allocation2 [shape = 'u8[32768]{0}', space=vmem, size = 0x8000, scoped, tag = 'input window, operand 1, single buffered']
    #allocation3 [shape = 's32[1]{0}', space=sflag, size = 0x4, scoped, tag = 'scoped memory for tpu_custom_call.1']
    %9 = vsyncpa [#allocation3], 0
    // Predicated region
    $region2: #{tpu_custom_call.1} parent=1 // pred_check
      _
    $region3: #{tpu_custom_call.1} parent=1 // pred_check_branch
      %11 = sbr.rel (0) target = $region5
    $region4: #{tpu_custom_call.1} parent=1 // pred_region
      _
    $region5: #{tpu_custom_call.1} parent=1 // pred_fallthru
      _
    // Predicated region
    $region6: #{tpu_custom_call.1} parent=1 // pred_check
      _
    $region7: #{tpu_custom_call.1} parent=1 // pred_check_branch
      %13 = sbr.rel (0) target = $region9
    $region8: #{tpu_custom_call.1} parent=1 // pred_region
      %s15 = ssub.s32 1024, 1024
      %16 = vsyncadd [#allocation3], %s15
      %s17 = sshll.u32 [#allocation2], 4
      %s18 = int_to_ptr.vmem [resolvable:$true] %s17
      %23 = dma.hbm_to_vmem [thread:$0]  %s1, 1024, %s18, [#allocation3], 128, 128, 8
    $region9: #{tpu_custom_call.1} parent=1 // pred_fallthru
      _
    // Predicated region
    $region10: #{tpu_custom_call.1} parent=1 // pred_check
      _
    $region11: #{tpu_custom_call.1} parent=1 // pred_check_branch
      %25 = sbr.rel (0) target = $region13
    $region12: #{tpu_custom_call.1} parent=1 // pred_region
      _
    $region13: #{tpu_custom_call.1} parent=1 // pred_fallthru
      _
    // Predicated region
    $region14: #{tpu_custom_call.1} parent=1 // pred_check
      _
    $region15: #{tpu_custom_call.1} parent=1 // pred_check_branch
      %27 = sbr.rel (0) target = $region17
    $region16: #{tpu_custom_call.1} parent=1 // pred_region
      _
    $region17: #{tpu_custom_call.1} parent=1 // pred_fallthru
      _
    // Predicated region
    $region18: #{tpu_custom_call.1} parent=1 // pred_check
      _
    $region19: #{tpu_custom_call.1} parent=1 // pred_check_branch
      %29 = sbr.rel (0) target = $region21
    $region20: #{tpu_custom_call.1} parent=1 // pred_region
      %30 = dma.done [#allocation3], 1024
    $region21: #{tpu_custom_call.1} parent=1 // pred_fallthru
      _
    %v31 = vld [vmem:[%s0] sm:$0xff]
    %v32 = vld [vmem:[#allocation2] sm:$0xff]
    %v33 = vld [vmem:[#allocation2 + $0x8] sm:$0xff]
    %v34 = vld [vmem:[#allocation2 + $0x10] sm:$0xff]
    %v35 = vld [vmem:[#allocation2 + $0x18] sm:$0xff]
    %v36 = vld [vmem:[#allocation2 + $0x20] sm:$0xff]
    %v37 = vld [vmem:[#allocation2 + $0x28] sm:$0xff]
    %v38 = vld [vmem:[#allocation2 + $0x30] sm:$0xff]
    %v39 = vld [vmem:[#allocation2 + $0x38] sm:$0xff]
    %v40 = vlaneseq
    %v41 = vshrl.u32 %v40, 7
    %v42 = vsub.s32 0, %v41
    %v43 = vrot.slane %v31, %v42
    %45 = vbcast.lane.b32.xlu0 %v43, 256
    %v46 = vpop.permute.xlu0 %45
    %v47 = vlaneseq
    %v48 = vshrl.u32 %v47, 7
    %v49 = vsub.s32 1, %v48
    %v50 = vrot.slane %v31, %v49
    %52 = vbcast.lane.b32.xlu0 %v50, 256
    %v53 = vpop.permute.xlu0 %52
    %v54 = vlaneseq
    %v55 = vshrl.u32 %v54, 7
    %v56 = vsub.s32 2, %v55
    %v57 = vrot.slane %v31, %v56
    %59 = vbcast.lane.b32.xlu0 %v57, 256
    %v60 = vpop.permute.xlu0 %59
    %v61 = vlaneseq
    %v62 = vshrl.u32 %v61, 7
    %v63 = vsub.s32 3, %v62
    %v64 = vrot.slane %v31, %v63
    %66 = vbcast.lane.b32.xlu0 %v64, 256
    %v67 = vpop.permute.xlu0 %66
    %v68 = vlaneseq
    %v69 = vshrl.u32 %v68, 7
    %v70 = vsub.s32 4, %v69
    %v71 = vrot.slane %v31, %v70
    %73 = vbcast.lane.b32.xlu0 %v71, 256
    %v74 = vpop.permute.xlu0 %73
    %v75 = vlaneseq
    %v76 = vshrl.u32 %v75, 7
    %v77 = vsub.s32 5, %v76
    %v78 = vrot.slane %v31, %v77
    %80 = vbcast.lane.b32.xlu0 %v78, 256
    %v81 = vpop.permute.xlu0 %80
    %v82 = vlaneseq
    %v83 = vshrl.u32 %v82, 7
    %v84 = vsub.s32 6, %v83
    %v85 = vrot.slane %v31, %v84
    %87 = vbcast.lane.b32.xlu0 %v85, 256
    %v88 = vpop.permute.xlu0 %87
    %v89 = vlaneseq
    %v90 = vshrl.u32 %v89, 7
    %v91 = vsub.s32 7, %v90
    %v92 = vrot.slane %v31, %v91
    %94 = vbcast.lane.b32.xlu0 %v92, 256
    %v95 = vpop.permute.xlu0 %94
    %v96 = vmul.f32 %v46, %v32
    %v97 = vmul.f32 %v53, %v33
    %v98 = vmul.f32 %v60, %v34
    %v99 = vmul.f32 %v67, %v35
    %v100 = vmul.f32 %v74, %v36
    %v101 = vmul.f32 %v81, %v37
    %v102 = vmul.f32 %v88, %v38
    %v103 = vmul.f32 %v95, %v39
    %vm104 = vcmask 261120
    %v105 = vsel %vm104, %v96, 0.0
    %v106 = vrot.slane %v105, 4
    %v107 = vadd.f32 %v105, %v106
    %v108 = vrot.slane %v107, 2
    %v109 = vadd.f32 %v107, %v108
    %v110 = vrot.slane %v109, 1
    %v111 = vadd.f32 %v109, %v110
    %v112 = vsel %vm104, %v97, 0.0
    %v113 = vrot.slane %v112, 4
    %v114 = vadd.f32 %v112, %v113
    %v115 = vrot.slane %v114, 2
    %v116 = vadd.f32 %v114, %v115
    %v117 = vrot.slane %v116, 1
    %v118 = vadd.f32 %v116, %v117
    %v119 = vsel %vm104, %v98, 0.0
    %v120 = vrot.slane %v119, 4
    %v121 = vadd.f32 %v119, %v120
    %v122 = vrot.slane %v121, 2
    %v123 = vadd.f32 %v121, %v122
    %v124 = vrot.slane %v123, 1
    %v125 = vadd.f32 %v123, %v124
    %v126 = vsel %vm104, %v99, 0.0
    %v127 = vrot.slane %v126, 4
    %v128 = vadd.f32 %v126, %v127
    %v129 = vrot.slane %v128, 2
    %v130 = vadd.f32 %v128, %v129
    %v131 = vrot.slane %v130, 1
    %v132 = vadd.f32 %v130, %v131
    %v133 = vsel %vm104, %v100, 0.0
    %v134 = vrot.slane %v133, 4
    %v135 = vadd.f32 %v133, %v134
    %v136 = vrot.slane %v135, 2
    %v137 = vadd.f32 %v135, %v136
    %v138 = vrot.slane %v137, 1
    %v139 = vadd.f32 %v137, %v138
    %v140 = vsel %vm104, %v101, 0.0
    %v141 = vrot.slane %v140, 4
    %v142 = vadd.f32 %v140, %v141
    %v143 = vrot.slane %v142, 2
    %v144 = vadd.f32 %v142, %v143
    %v145 = vrot.slane %v144, 1
    %v146 = vadd.f32 %v144, %v145
    %v147 = vsel %vm104, %v102, 0.0
    %v148 = vrot.slane %v147, 4
    %v149 = vadd.f32 %v147, %v148
    %v150 = vrot.slane %v149, 2
    %v151 = vadd.f32 %v149, %v150
    %v152 = vrot.slane %v151, 1
    %v153 = vadd.f32 %v151, %v152
    %v154 = vsel %vm104, %v103, 0.0
    %v155 = vrot.slane %v154, 4
    %v156 = vadd.f32 %v154, %v155
    %v157 = vrot.slane %v156, 2
    %v158 = vadd.f32 %v156, %v157
    %v159 = vrot.slane %v158, 1
    %v160 = vadd.f32 %v158, %v159
    %vm161 = vcmask 64512
    %v162 = vsel %vm161, %v31, 0.0
    %163 = vadd.xlane.f32.xlu0 %v162
    %v164 = vpop.xlane.xlu0 %163
    %v165 = vld [vmem:[%s2] sm:$0xff]
    %v166 = vld [vmem:[%s2 + $0x8] sm:$0xff]
    %v167 = vld [vmem:[%s2 + $0x10] sm:$0xff]
    %v168 = vld [vmem:[%s2 + $0x18] sm:$0xff]
    %vm177 = vcmask 1041409
    %v178 = vsel %vm177, %v118, %v111
    %vm179 = vcmask 1042434
    %v180 = vsel %vm179, %v125, %v178
    %vm181 = vcmask 1043459
    %v182 = vsel %vm181, %v132, %v180
    %vm183 = vcmask 1044484
    %v184 = vsel %vm183, %v139, %v182
    %vm185 = vcmask 1045509
    %v186 = vsel %vm185, %v146, %v184
    %vm187 = vcmask 1046534
    %v188 = vsel %vm187, %v153, %v186
    %vm189 = vcmask 1047559
    %v190 = vsel %vm189, %v160, %v188
    %v191 = vsel %vm104, %v190, 0
    %193 = vmatprep.subr.mxu0 0.0
    %194 = vmatpush1.msra.mxu0 0.0
    %195 = vmatprep.subr.mxu0 0.0
    %196 = vmatpush1.msra.mxu0 0.0
    %197 = vmatprep.subr.mxu0 0.0
    %198 = vmatpush1.msra.mxu0 0.0
    %199 = vmatprep.subr.mxu0 0.0
    %200 = vmatpush1.msra.mxu0 0.0
    %201 = vmatprep.subr.mxu0 0.0
    %202 = vmatpush1.msra.mxu0 0.0
    %203 = vmatprep.subr.mxu0 0.0
    %204 = vmatpush1.msra.mxu0 0.0
    %205 = vmatprep.subr.mxu0 0.0
    %206 = vmatpush1.msra.mxu0 0.0
    %207 = vmatprep.subr.mxu0 0.0
    %208 = vmatpush1.msra.mxu0 0.0
    %209 = vmatprep.subr.mxu0 0.0
    %210 = vmatpush1.msra.mxu0 0.0
    %211 = vmatprep.subr.mxu0 0.0
    %212 = vmatpush1.msra.mxu0 0.0
    %213 = vmatprep.subr.mxu0 0.0
    %214 = vmatpush1.msra.mxu0 0.0
    %215 = vmatprep.subr.mxu0 0.0
    %216 = vmatpush1.msra.mxu0 0.0
    %217 = vmatprep.subr.mxu0 0.0
    %218 = vmatpush1.msra.mxu0 %v168
    %219 = vmatprep.subr.mxu0 0.0
    %220 = vmatpush1.msra.mxu0 %v167
    %221 = vmatprep.subr.mxu0 0.0
    %222 = vmatpush1.msra.mxu0 %v166
    %223 = vmatprep.subr.mxu0 0.0
    %224 = vmatpush1.msra.mxu0 %v165
    %225 = vmatprep.subr.mxu0 0.0
    %226 = vmatpush2.msra.mxu0 0.0
    %227 = vmatprep.subr.mxu0 0.0
    %228 = vmatpush2.msra.mxu0 0.0
    %229 = vmatprep.subr.mxu0 0.0
    %230 = vmatpush2.msra.mxu0 0.0
    %231 = vmatprep.subr.mxu0 0.0
    %232 = vmatpush2.msra.mxu0 0.0
    %233 = vmatprep.subr.mxu0 0.0
    %234 = vmatpush2.msra.mxu0 0.0
    %235 = vmatprep.subr.mxu0 0.0
    %236 = vmatpush2.msra.mxu0 0.0
    %237 = vmatprep.subr.mxu0 0.0
    %238 = vmatpush2.msra.mxu0 0.0
    %239 = vmatprep.subr.mxu0 0.0
    %240 = vmatpush2.msra.mxu0 0.0
    %241 = vmatprep.subr.mxu0 0.0
    %242 = vmatpush2.msra.mxu0 0.0
    %243 = vmatprep.subr.mxu0 0.0
    %244 = vmatpush2.msra.mxu0 0.0
    %245 = vmatprep.subr.mxu0 0.0
    %246 = vmatpush2.msra.mxu0 0.0
    %247 = vmatprep.subr.mxu0 0.0
    %248 = vmatpush2.msra.mxu0 0.0
    %249 = vmatprep.subr.mxu0 0.0
    %250 = vmatpush2.msra.mxu0 0.0
    %251 = vmatprep.subr.mxu0 0.0
    %252 = vmatpush2.msra.mxu0 0.0
    %253 = vmatprep.subr.mxu0 0.0
    %254 = vmatpush2.msra.mxu0 0.0
    %255 = vmatprep.subr.mxu0 0.0
    %256 = vmatpush2.msra.mxu0 0.0
    %257 = vmatprep.mubr.f32.mxu0 0.0
    %258 = vmatmul.mubr.f32.gmra.mxu0 %v191
    %v259 = vpop.f32.mrf.mxu0
    %v260 = vadd.f32 0.0, %v259
    %v261 = vpop.f32.mrf.mxu0
    %262 = vdwg.mxu0
    %v263 = vrcp.pop %v164
    %v264 = vmul.f32 %v260, %v263
    %v265 = vld [vmem:[%s3] sm:$0x1]
    %v267 = vlaneseq
    %v268 = vshrl.u32 %v267, 7
    %v269 = vsub.s32 0, %v268
    %v270 = vrot.slane %v265, %v269
    %v272 = vadd.f32 %v264, %v270
    %vm273 = vcmask 31744
    %v274 = vsel %vm273, %v272, -inf
    %275 = vmax.xlane.f32.xlu0 %v274
    %v276 = vpop.xlane.xlu0 %275
    %v277 = vsub.f32 %v272, %v276
    %v278 = vmul.f32 %v277, 1.442695
    %v279 = vpow.pop %v278
    %v280 = vsel %vm273, %v279, 0.0
    %281 = vadd.xlane.f32.xlu0 %v280
    %v282 = vpop.xlane.xlu0 %281
    %v283 = vlog2.pop %v282
    %v284 = vmul.f32 %v283, 0.6931472
    %v285 = vsub.f32 %v277, %v284
    %286 = vst.msk [vmem:[%s4] sm:$0xff] %vm273, %v285
    // Predicated region
    $region22: #{tpu_custom_call.1} parent=1 // pred_check
      _
    $region23: #{tpu_custom_call.1} parent=1 // pred_check_branch
      %288 = sbr.rel (0) target = $region25
    $region24: #{tpu_custom_call.1} parent=1 // pred_region
      _
    $region25: #{tpu_custom_call.1} parent=1 // pred_fallthru
      _
    // Predicated region
    $region26: #{tpu_custom_call.1} parent=1 // pred_check
      _
    $region27: #{tpu_custom_call.1} parent=1 // pred_check_branch
      %290 = sbr.rel (0) target = $region29
    $region28: #{tpu_custom_call.1} parent=1 // pred_region
      _
    $region29: #{tpu_custom_call.1} parent=1 // pred_fallthru
      _
    %291 = vsyncpa [#allocation3], 1

</llo_original>
